<compile_context>
chip_gen: v7x
topology: tpu7x:2x2x1
jax: 0.10.0
libtpu: 0.0.40
codegen_flags: <defaults>
</compile_context>

<pallas_src>
import jax
import jax.numpy as jnp
from jax.experimental import pallas as pl
from jax.experimental.pallas import tpu as pltpu


def lstm_kernel(x_ref, wih_ref, whh_ref, b_ref, wlin_ref, blin_ref, out_ref):
    """Fused LSTM forward + final Linear.

    x_ref:    (B, T, I)  raw input sequence (batch_first, PyTorch layout).
    wih_ref:  (I, 4H)    input->gate weights, transposed; g-gate cols pre-scaled x2.
    whh_ref:  (H, 4H)    hidden->gate weights, transposed; g-gate cols pre-scaled x2.
    b_ref:    (1, 4H)    b_ih + b_hh; g-gate cols pre-scaled x2.
    wlin_ref: (O, H)     final Linear weight (PyTorch layout, lane-aligned rows).
    blin_ref: (O,)       final Linear bias (SMEM scalars).
    out_ref:  (B, O)
    PyTorch gate order: i, f, g, o.
    """
    B, T, I = x_ref.shape
    H = whh_ref.shape[0]
    O = out_ref.shape[1]

    # ---- Input projection for ALL time steps: one MXU matmul, in-kernel.
    # (B,T,I) -> (B*T,I): merge of leading dims, minor dim unchanged (cheap).
    x2d = x_ref[...].reshape(B * T, I)
    gx = jnp.dot(x2d, wih_ref[...], preferred_element_type=jnp.float32) + b_ref[...]
    gx = gx.reshape(B, T, 4 * H)  # ~2 vregs at these sizes; stays in registers.

    # Recurrent weight loaded once, loop-invariant across the unrolled loop.
    # TODO(synk): verify in the bundle dump that the (H,4H) MXU weight push is
    # hoisted (not re-issued per step); if not, switch to explicit
    # pltpu.matmul_push_rhs / matmul_acc_lhs / matmul_pop.
    whh = whh_ref[...]

    h = jnp.zeros((B, H), jnp.float32)
    c = jnp.zeros((B, H), jnp.float32)

    # T is a trace-time constant -> fully unrolled recurrence, static slices.
    # TODO(synk): for large T, switch to lax.fori_loop(..., unroll=k) or a
    # time-chunked grid with h/c/gx in VMEM scratch to bound vreg live ranges
    # (re-derive the VMEM budget against v7x's 64 MiB when doing so).
    for t in range(T):
        # Only the recurrent matmul is on the serial critical path; the input
        # projection was hoisted above the loop.
        gates = gx[:, t, :] + jnp.dot(h, whh, preferred_element_type=jnp.float32)

        # Single full-width EUP pass: one sigmoid over (B, 4H). The g-gate's
        # tanh is reconstructed as tanh(z) = 2*sigmoid(2z) - 1; the 2x scale
        # was folded into the g-gate columns of W_ih / W_hh / b offline.
        sig = jax.nn.sigmoid(gates)
        i_g = sig[:, 0 * H:1 * H]
        f_g = sig[:, 1 * H:2 * H]
        g_g = 2.0 * sig[:, 2 * H:3 * H] - 1.0   # VPU scale/shift (free VALU slot)
        o_g = sig[:, 3 * H:4 * H]

        c = f_g * c + i_g * g_g
        h = o_g * jnp.tanh(c)

    # ---- Final Linear on the last hidden state: VPU multiply + XLU lane
    # reduction instead of a <0.1%-utilization MXU matmul; bias from SMEM.
    wlin = wlin_ref[...]  # (O, H)
    cols = [jnp.sum(h * wlin[j, :], axis=-1, keepdims=True) + blin_ref[j]
            for j in range(O)]
    if O == 1:
        out_ref[...] = cols[0]
    else:
        out_ref[...] = jnp.concatenate(cols, axis=-1)


def prepare_params(w_ih, w_hh, b_ih, b_hh, w_lin, b_lin):
    """Convert PyTorch-layout parameters to the kernel layout, once, offline.

    w_ih: (4H, I), w_hh: (4H, H), b_ih/b_hh: (4H,) -- nn.LSTM layout (i,f,g,o).
    w_lin: (O, H), b_lin: (O,)                     -- nn.Linear layout.

    Folds b_ih + b_hh, transposes the LSTM weights for right-matmul, and folds
    the exact 2x scale into the g-gate rows (so the kernel can use the
    single-sigmoid tanh identity without double-applying the scale).
    """
    H = w_hh.shape[1]
    g_scale = jnp.concatenate(
        [jnp.ones((H,), jnp.float32), jnp.ones((H,), jnp.float32),
         jnp.full((H,), 2.0, jnp.float32), jnp.ones((H,), jnp.float32)])
    wih_t = (w_ih * g_scale[:, None]).T            # (I, 4H)
    whh_t = (w_hh * g_scale[:, None]).T            # (H, 4H)
    b = ((b_ih + b_hh) * g_scale).reshape(1, -1)   # (1, 4H)
    wlin_oh = w_lin.astype(jnp.float32)            # (O, H)
    blin = b_lin.reshape(-1).astype(jnp.float32)   # (O,)
    return wih_t, whh_t, b, wlin_oh, blin


def lstm_module_forward(x, wih_t, whh_t, b, wlin_oh, blin):
    """x: (B, T, I) float32, batch_first. Params from prepare_params().
    Returns (B * O,) like `.reshape(-1)` in the PyTorch module."""
    B, T, I = x.shape
    O = wlin_oh.shape[0]

    out = pl.pallas_call(
        lstm_kernel,
        out_shape=jax.ShapeDtypeStruct((B, O), jnp.float32),
        in_specs=[
            pl.BlockSpec(memory_space=pltpu.MemorySpace.VMEM),  # x (B,T,I)
            pl.BlockSpec(memory_space=pltpu.MemorySpace.VMEM),  # W_ih^T (g-scaled)
            pl.BlockSpec(memory_space=pltpu.MemorySpace.VMEM),  # W_hh^T (g-scaled)
            pl.BlockSpec(memory_space=pltpu.MemorySpace.VMEM),  # bias   (g-scaled)
            pl.BlockSpec(memory_space=pltpu.MemorySpace.VMEM),  # W_lin (O,H)
            pl.BlockSpec(memory_space=pltpu.MemorySpace.SMEM),  # b_lin scalars
        ],
        out_specs=pl.BlockSpec(memory_space=pltpu.MemorySpace.VMEM),
        # Gridless single-TC launch: correct at B=2.
        # TODO(synk): when B >= ~16, add a batch grid axis with
        # dimension_semantics=("parallel",) to use both v7x TensorCores.
    )(x, wih_t, whh_t, b, wlin_oh, blin)

    return out.reshape(-1)


def _reference_forward(x, w_ih, w_hh, b_ih, b_hh, w_lin, b_lin):
    """Pure-JAX reference (PyTorch LSTM + Linear semantics, unscaled params)."""
    B, T, I = x.shape
    H = w_hh.shape[1]
    wih_t, whh_t, bias = w_ih.T, w_hh.T, b_ih + b_hh

    def step(carry, x_t):
        h, c = carry
        gates = x_t @ wih_t + h @ whh_t + bias
        i = jax.nn.sigmoid(gates[:, 0 * H:1 * H])
        f = jax.nn.sigmoid(gates[:, 1 * H:2 * H])
        g = jnp.tanh(gates[:, 2 * H:3 * H])
        o = jax.nn.sigmoid(gates[:, 3 * H:4 * H])
        c = f * c + i * g
        h = o * jnp.tanh(c)
        return (h, c), None

    h0 = jnp.zeros((B, H), jnp.float32)
    c0 = jnp.zeros((B, H), jnp.float32)
    (h_last, _), _ = jax.lax.scan(step, (h0, c0), jnp.transpose(x, (1, 0, 2)))
    return (h_last @ w_lin.T + b_lin).reshape(-1)


if __name__ == "__main__":
    B, T, I, H, O = 2, 8, 4, 32, 1

    key = jax.random.PRNGKey(0)
    ks = jax.random.split(key, 7)
    scale = 1.0 / jnp.sqrt(H)

    # PyTorch-native parameter layouts: nn.LSTM (4H,I)/(4H,H)/(4H,), nn.Linear (O,H)/(O,).
    w_ih = jax.random.uniform(ks[0], (4 * H, I), jnp.float32, -scale, scale)
    w_hh = jax.random.uniform(ks[1], (4 * H, H), jnp.float32, -scale, scale)
    b_ih = jax.random.uniform(ks[2], (4 * H,), jnp.float32, -scale, scale)
    b_hh = jax.random.uniform(ks[3], (4 * H,), jnp.float32, -scale, scale)
    w_lin = jax.random.uniform(ks[4], (O, H), jnp.float32, -scale, scale)
    b_lin = jax.random.uniform(ks[5], (O,), jnp.float32, -scale, scale)
    x = jax.random.normal(ks[6], (B, T, I), jnp.float32)

    params = prepare_params(w_ih, w_hh, b_ih, b_hh, w_lin, b_lin)

    pred = lstm_module_forward(x, *params)
    pred = jax.block_until_ready(pred)

    ref = _reference_forward(x, w_ih, w_hh, b_ih, b_hh, w_lin, b_lin)
    assert pred.shape == (B * O,)
    assert jnp.allclose(pred, ref, atol=1e-5, rtol=1e-5), (pred, ref)

    print("KERNEL_OK")
</pallas_src>

<mosaic_0001>
module attributes {stable_mosaic.version = 11 : i64} {
  func.func @lstm_kernel(%arg0: memref<2x8x4xf32, #tpu.memory_space<vmem>>, %arg1: memref<4x128xf32, #tpu.memory_space<vmem>>, %arg2: memref<32x128xf32, #tpu.memory_space<vmem>>, %arg3: memref<1x128xf32, #tpu.memory_space<vmem>>, %arg4: memref<1x32xf32, #tpu.memory_space<vmem>>, %arg5: memref<1xf32, #tpu.memory_space<smem>>, %arg6: memref<2x1xf32, #tpu.memory_space<vmem>>) attributes {dimension_semantics = [], scalar_prefetch = 0 : i64, scratch_operands = 0 : i64, tpu.core_type = #tpu.core_type<tc>} {
    %c0 = arith.constant 0 : index
    %c0_0 = arith.constant 0 : index
    %c0_1 = arith.constant 0 : index
    %0 = vector.load %arg0[%c0, %c0_0, %c0_1] : memref<2x8x4xf32, #tpu.memory_space<vmem>>, vector<2x8x4xf32>
    %1 = vector.shape_cast %0 : vector<2x8x4xf32> to vector<16x4xf32>
    %c0_2 = arith.constant 0 : index
    %c0_3 = arith.constant 0 : index
    %2 = vector.load %arg1[%c0_2, %c0_3] : memref<4x128xf32, #tpu.memory_space<vmem>>, vector<4x128xf32>
    %cst = arith.constant dense<0.000000e+00> : vector<16x128xf32>
    %3 = tpu.matmul %1, %2, %cst {dimension_numbers = #tpu.dot_dimension_numbers<[1], [0], [0], [1], [0, 0, 1, 1], [], []>} : vector<16x4xf32>, vector<4x128xf32>, vector<16x128xf32> -> vector<16x128xf32>
    %c0_4 = arith.constant 0 : index
    %c0_5 = arith.constant 0 : index
    %4 = vector.load %arg3[%c0_4, %c0_5] : memref<1x128xf32, #tpu.memory_space<vmem>>, vector<1x128xf32>
    %5 = vector.broadcast %4 : vector<1x128xf32> to vector<16x128xf32>
    %6 = arith.addf %3, %5 : vector<16x128xf32>
    %7 = vector.shape_cast %6 : vector<16x128xf32> to vector<2x8x128xf32>
    %c0_6 = arith.constant 0 : index
    %c0_7 = arith.constant 0 : index
    %8 = vector.load %arg2[%c0_6, %c0_7] : memref<32x128xf32, #tpu.memory_space<vmem>>, vector<32x128xf32>
    %cst_8 = arith.constant 0.000000e+00 : f32
    %9 = vector.broadcast %cst_8 : f32 to vector<2x32xf32>
    %cst_9 = arith.constant 0.000000e+00 : f32
    %10 = vector.broadcast %cst_9 : f32 to vector<2x32xf32>
    %11 = vector.extract_strided_slice %7 {offsets = [0, 0, 0], sizes = [2, 1, 128], strides = [1, 1, 1]} : vector<2x8x128xf32> to vector<2x1x128xf32>
    %12 = vector.shape_cast %11 : vector<2x1x128xf32> to vector<2x128xf32>
    %cst_10 = arith.constant dense<0.000000e+00> : vector<2x128xf32>
    %13 = tpu.matmul %9, %8, %cst_10 {dimension_numbers = #tpu.dot_dimension_numbers<[1], [0], [0], [1], [0, 0, 1, 1], [], []>} : vector<2x32xf32>, vector<32x128xf32>, vector<2x128xf32> -> vector<2x128xf32>
    %14 = arith.addf %12, %13 : vector<2x128xf32>
    %15 = arith.negf %14 : vector<2x128xf32>
    %16 = math.exp %15 : vector<2x128xf32>
    %cst_11 = arith.constant 1.000000e+00 : f32
    %17 = vector.broadcast %cst_11 : f32 to vector<2x128xf32>
    %18 = arith.addf %17, %16 : vector<2x128xf32>
    %19 = arith.divf %17, %18 : vector<2x128xf32>
    %20 = vector.extract_strided_slice %19 {offsets = [0, 0], sizes = [2, 32], strides = [1, 1]} : vector<2x128xf32> to vector<2x32xf32>
    %21 = vector.extract_strided_slice %19 {offsets = [0, 32], sizes = [2, 32], strides = [1, 1]} : vector<2x128xf32> to vector<2x32xf32>
    %22 = vector.extract_strided_slice %19 {offsets = [0, 64], sizes = [2, 32], strides = [1, 1]} : vector<2x128xf32> to vector<2x32xf32>
    %cst_12 = arith.constant 2.000000e+00 : f32
    %23 = vector.broadcast %cst_12 : f32 to vector<2x32xf32>
    %24 = arith.mulf %23, %22 : vector<2x32xf32>
    %cst_13 = arith.constant 1.000000e+00 : f32
    %25 = vector.broadcast %cst_13 : f32 to vector<2x32xf32>
    %26 = arith.subf %24, %25 : vector<2x32xf32>
    %27 = vector.extract_strided_slice %19 {offsets = [0, 96], sizes = [2, 32], strides = [1, 1]} : vector<2x128xf32> to vector<2x32xf32>
    %28 = arith.mulf %21, %10 : vector<2x32xf32>
    %29 = arith.mulf %20, %26 : vector<2x32xf32>
    %30 = arith.addf %28, %29 : vector<2x32xf32>
    %31 = math.tanh %30 : vector<2x32xf32>
    %32 = arith.mulf %27, %31 : vector<2x32xf32>
    %33 = vector.extract_strided_slice %7 {offsets = [0, 1, 0], sizes = [2, 1, 128], strides = [1, 1, 1]} : vector<2x8x128xf32> to vector<2x1x128xf32>
    %34 = vector.shape_cast %33 : vector<2x1x128xf32> to vector<2x128xf32>
    %cst_14 = arith.constant dense<0.000000e+00> : vector<2x128xf32>
    %35 = tpu.matmul %32, %8, %cst_14 {dimension_numbers = #tpu.dot_dimension_numbers<[1], [0], [0], [1], [0, 0, 1, 1], [], []>} : vector<2x32xf32>, vector<32x128xf32>, vector<2x128xf32> -> vector<2x128xf32>
    %36 = arith.addf %34, %35 : vector<2x128xf32>
    %37 = arith.negf %36 : vector<2x128xf32>
    %38 = math.exp %37 : vector<2x128xf32>
    %cst_15 = arith.constant 1.000000e+00 : f32
    %39 = vector.broadcast %cst_15 : f32 to vector<2x128xf32>
    %40 = arith.addf %39, %38 : vector<2x128xf32>
    %41 = arith.divf %39, %40 : vector<2x128xf32>
    %42 = vector.extract_strided_slice %41 {offsets = [0, 0], sizes = [2, 32], strides = [1, 1]} : vector<2x128xf32> to vector<2x32xf32>
    %43 = vector.extract_strided_slice %41 {offsets = [0, 32], sizes = [2, 32], strides = [1, 1]} : vector<2x128xf32> to vector<2x32xf32>
    %44 = vector.extract_strided_slice %41 {offsets = [0, 64], sizes = [2, 32], strides = [1, 1]} : vector<2x128xf32> to vector<2x32xf32>
    %cst_16 = arith.constant 2.000000e+00 : f32
    %45 = vector.broadcast %cst_16 : f32 to vector<2x32xf32>
    %46 = arith.mulf %45, %44 : vector<2x32xf32>
    %cst_17 = arith.constant 1.000000e+00 : f32
    %47 = vector.broadcast %cst_17 : f32 to vector<2x32xf32>
    %48 = arith.subf %46, %47 : vector<2x32xf32>
    %49 = vector.extract_strided_slice %41 {offsets = [0, 96], sizes = [2, 32], strides = [1, 1]} : vector<2x128xf32> to vector<2x32xf32>
    %50 = arith.mulf %43, %30 : vector<2x32xf32>
    %51 = arith.mulf %42, %48 : vector<2x32xf32>
    %52 = arith.addf %50, %51 : vector<2x32xf32>
    %53 = math.tanh %52 : vector<2x32xf32>
    %54 = arith.mulf %49, %53 : vector<2x32xf32>
    %55 = vector.extract_strided_slice %7 {offsets = [0, 2, 0], sizes = [2, 1, 128], strides = [1, 1, 1]} : vector<2x8x128xf32> to vector<2x1x128xf32>
    %56 = vector.shape_cast %55 : vector<2x1x128xf32> to vector<2x128xf32>
    %cst_18 = arith.constant dense<0.000000e+00> : vector<2x128xf32>
    %57 = tpu.matmul %54, %8, %cst_18 {dimension_numbers = #tpu.dot_dimension_numbers<[1], [0], [0], [1], [0, 0, 1, 1], [], []>} : vector<2x32xf32>, vector<32x128xf32>, vector<2x128xf32> -> vector<2x128xf32>
    %58 = arith.addf %56, %57 : vector<2x128xf32>
    %59 = arith.negf %58 : vector<2x128xf32>
    %60 = math.exp %59 : vector<2x128xf32>
    %cst_19 = arith.constant 1.000000e+00 : f32
    %61 = vector.broadcast %cst_19 : f32 to vector<2x128xf32>
    %62 = arith.addf %61, %60 : vector<2x128xf32>
    %63 = arith.divf %61, %62 : vector<2x128xf32>
    %64 = vector.extract_strided_slice %63 {offsets = [0, 0], sizes = [2, 32], strides = [1, 1]} : vector<2x128xf32> to vector<2x32xf32>
    %65 = vector.extract_strided_slice %63 {offsets = [0, 32], sizes = [2, 32], strides = [1, 1]} : vector<2x128xf32> to vector<2x32xf32>
    %66 = vector.extract_strided_slice %63 {offsets = [0, 64], sizes = [2, 32], strides = [1, 1]} : vector<2x128xf32> to vector<2x32xf32>
    %cst_20 = arith.constant 2.000000e+00 : f32
    %67 = vector.broadcast %cst_20 : f32 to vector<2x32xf32>
    %68 = arith.mulf %67, %66 : vector<2x32xf32>
    %cst_21 = arith.constant 1.000000e+00 : f32
    %69 = vector.broadcast %cst_21 : f32 to vector<2x32xf32>
    %70 = arith.subf %68, %69 : vector<2x32xf32>
    %71 = vector.extract_strided_slice %63 {offsets = [0, 96], sizes = [2, 32], strides = [1, 1]} : vector<2x128xf32> to vector<2x32xf32>
    %72 = arith.mulf %65, %52 : vector<2x32xf32>
    %73 = arith.mulf %64, %70 : vector<2x32xf32>
    %74 = arith.addf %72, %73 : vector<2x32xf32>
    %75 = math.tanh %74 : vector<2x32xf32>
    %76 = arith.mulf %71, %75 : vector<2x32xf32>
    %77 = vector.extract_strided_slice %7 {offsets = [0, 3, 0], sizes = [2, 1, 128], strides = [1, 1, 1]} : vector<2x8x128xf32> to vector<2x1x128xf32>
    %78 = vector.shape_cast %77 : vector<2x1x128xf32> to vector<2x128xf32>
    %cst_22 = arith.constant dense<0.000000e+00> : vector<2x128xf32>
    %79 = tpu.matmul %76, %8, %cst_22 {dimension_numbers = #tpu.dot_dimension_numbers<[1], [0], [0], [1], [0, 0, 1, 1], [], []>} : vector<2x32xf32>, vector<32x128xf32>, vector<2x128xf32> -> vector<2x128xf32>
    %80 = arith.addf %78, %79 : vector<2x128xf32>
    %81 = arith.negf %80 : vector<2x128xf32>
    %82 = math.exp %81 : vector<2x128xf32>
    %cst_23 = arith.constant 1.000000e+00 : f32
    %83 = vector.broadcast %cst_23 : f32 to vector<2x128xf32>
    %84 = arith.addf %83, %82 : vector<2x128xf32>
    %85 = arith.divf %83, %84 : vector<2x128xf32>
    %86 = vector.extract_strided_slice %85 {offsets = [0, 0], sizes = [2, 32], strides = [1, 1]} : vector<2x128xf32> to vector<2x32xf32>
    %87 = vector.extract_strided_slice %85 {offsets = [0, 32], sizes = [2, 32], strides = [1, 1]} : vector<2x128xf32> to vector<2x32xf32>
    %88 = vector.extract_strided_slice %85 {offsets = [0, 64], sizes = [2, 32], strides = [1, 1]} : vector<2x128xf32> to vector<2x32xf32>
    %cst_24 = arith.constant 2.000000e+00 : f32
    %89 = vector.broadcast %cst_24 : f32 to vector<2x32xf32>
    %90 = arith.mulf %89, %88 : vector<2x32xf32>
    %cst_25 = arith.constant 1.000000e+00 : f32
    %91 = vector.broadcast %cst_25 : f32 to vector<2x32xf32>
    %92 = arith.subf %90, %91 : vector<2x32xf32>
    %93 = vector.extract_strided_slice %85 {offsets = [0, 96], sizes = [2, 32], strides = [1, 1]} : vector<2x128xf32> to vector<2x32xf32>
    %94 = arith.mulf %87, %74 : vector<2x32xf32>
    %95 = arith.mulf %86, %92 : vector<2x32xf32>
    %96 = arith.addf %94, %95 : vector<2x32xf32>
    %97 = math.tanh %96 : vector<2x32xf32>
    %98 = arith.mulf %93, %97 : vector<2x32xf32>
    %99 = vector.extract_strided_slice %7 {offsets = [0, 4, 0], sizes = [2, 1, 128], strides = [1, 1, 1]} : vector<2x8x128xf32> to vector<2x1x128xf32>
    %100 = vector.shape_cast %99 : vector<2x1x128xf32> to vector<2x128xf32>
    %cst_26 = arith.constant dense<0.000000e+00> : vector<2x128xf32>
    %101 = tpu.matmul %98, %8, %cst_26 {dimension_numbers = #tpu.dot_dimension_numbers<[1], [0], [0], [1], [0, 0, 1, 1], [], []>} : vector<2x32xf32>, vector<32x128xf32>, vector<2x128xf32> -> vector<2x128xf32>
    %102 = arith.addf %100, %101 : vector<2x128xf32>
    %103 = arith.negf %102 : vector<2x128xf32>
    %104 = math.exp %103 : vector<2x128xf32>
    %cst_27 = arith.constant 1.000000e+00 : f32
    %105 = vector.broadcast %cst_27 : f32 to vector<2x128xf32>
    %106 = arith.addf %105, %104 : vector<2x128xf32>
    %107 = arith.divf %105, %106 : vector<2x128xf32>
    %108 = vector.extract_strided_slice %107 {offsets = [0, 0], sizes = [2, 32], strides = [1, 1]} : vector<2x128xf32> to vector<2x32xf32>
    %109 = vector.extract_strided_slice %107 {offsets = [0, 32], sizes = [2, 32], strides = [1, 1]} : vector<2x128xf32> to vector<2x32xf32>
    %110 = vector.extract_strided_slice %107 {offsets = [0, 64], sizes = [2, 32], strides = [1, 1]} : vector<2x128xf32> to vector<2x32xf32>
    %cst_28 = arith.constant 2.000000e+00 : f32
    %111 = vector.broadcast %cst_28 : f32 to vector<2x32xf32>
    %112 = arith.mulf %111, %110 : vector<2x32xf32>
    %cst_29 = arith.constant 1.000000e+00 : f32
    %113 = vector.broadcast %cst_29 : f32 to vector<2x32xf32>
    %114 = arith.subf %112, %113 : vector<2x32xf32>
    %115 = vector.extract_strided_slice %107 {offsets = [0, 96], sizes = [2, 32], strides = [1, 1]} : vector<2x128xf32> to vector<2x32xf32>
    %116 = arith.mulf %109, %96 : vector<2x32xf32>
    %117 = arith.mulf %108, %114 : vector<2x32xf32>
    %118 = arith.addf %116, %117 : vector<2x32xf32>
    %119 = math.tanh %118 : vector<2x32xf32>
    %120 = arith.mulf %115, %119 : vector<2x32xf32>
    %121 = vector.extract_strided_slice %7 {offsets = [0, 5, 0], sizes = [2, 1, 128], strides = [1, 1, 1]} : vector<2x8x128xf32> to vector<2x1x128xf32>
    %122 = vector.shape_cast %121 : vector<2x1x128xf32> to vector<2x128xf32>
    %cst_30 = arith.constant dense<0.000000e+00> : vector<2x128xf32>
    %123 = tpu.matmul %120, %8, %cst_30 {dimension_numbers = #tpu.dot_dimension_numbers<[1], [0], [0], [1], [0, 0, 1, 1], [], []>} : vector<2x32xf32>, vector<32x128xf32>, vector<2x128xf32> -> vector<2x128xf32>
    %124 = arith.addf %122, %123 : vector<2x128xf32>
    %125 = arith.negf %124 : vector<2x128xf32>
    %126 = math.exp %125 : vector<2x128xf32>
    %cst_31 = arith.constant 1.000000e+00 : f32
    %127 = vector.broadcast %cst_31 : f32 to vector<2x128xf32>
    %128 = arith.addf %127, %126 : vector<2x128xf32>
    %129 = arith.divf %127, %128 : vector<2x128xf32>
    %130 = vector.extract_strided_slice %129 {offsets = [0, 0], sizes = [2, 32], strides = [1, 1]} : vector<2x128xf32> to vector<2x32xf32>
    %131 = vector.extract_strided_slice %129 {offsets = [0, 32], sizes = [2, 32], strides = [1, 1]} : vector<2x128xf32> to vector<2x32xf32>
    %132 = vector.extract_strided_slice %129 {offsets = [0, 64], sizes = [2, 32], strides = [1, 1]} : vector<2x128xf32> to vector<2x32xf32>
    %cst_32 = arith.constant 2.000000e+00 : f32
    %133 = vector.broadcast %cst_32 : f32 to vector<2x32xf32>
    %134 = arith.mulf %133, %132 : vector<2x32xf32>
    %cst_33 = arith.constant 1.000000e+00 : f32
    %135 = vector.broadcast %cst_33 : f32 to vector<2x32xf32>
    %136 = arith.subf %134, %135 : vector<2x32xf32>
    %137 = vector.extract_strided_slice %129 {offsets = [0, 96], sizes = [2, 32], strides = [1, 1]} : vector<2x128xf32> to vector<2x32xf32>
    %138 = arith.mulf %131, %118 : vector<2x32xf32>
    %139 = arith.mulf %130, %136 : vector<2x32xf32>
    %140 = arith.addf %138, %139 : vector<2x32xf32>
    %141 = math.tanh %140 : vector<2x32xf32>
    %142 = arith.mulf %137, %141 : vector<2x32xf32>
    %143 = vector.extract_strided_slice %7 {offsets = [0, 6, 0], sizes = [2, 1, 128], strides = [1, 1, 1]} : vector<2x8x128xf32> to vector<2x1x128xf32>
    %144 = vector.shape_cast %143 : vector<2x1x128xf32> to vector<2x128xf32>
    %cst_34 = arith.constant dense<0.000000e+00> : vector<2x128xf32>
    %145 = tpu.matmul %142, %8, %cst_34 {dimension_numbers = #tpu.dot_dimension_numbers<[1], [0], [0], [1], [0, 0, 1, 1], [], []>} : vector<2x32xf32>, vector<32x128xf32>, vector<2x128xf32> -> vector<2x128xf32>
    %146 = arith.addf %144, %145 : vector<2x128xf32>
    %147 = arith.negf %146 : vector<2x128xf32>
    %148 = math.exp %147 : vector<2x128xf32>
    %cst_35 = arith.constant 1.000000e+00 : f32
    %149 = vector.broadcast %cst_35 : f32 to vector<2x128xf32>
    %150 = arith.addf %149, %148 : vector<2x128xf32>
    %151 = arith.divf %149, %150 : vector<2x128xf32>
    %152 = vector.extract_strided_slice %151 {offsets = [0, 0], sizes = [2, 32], strides = [1, 1]} : vector<2x128xf32> to vector<2x32xf32>
    %153 = vector.extract_strided_slice %151 {offsets = [0, 32], sizes = [2, 32], strides = [1, 1]} : vector<2x128xf32> to vector<2x32xf32>
    %154 = vector.extract_strided_slice %151 {offsets = [0, 64], sizes = [2, 32], strides = [1, 1]} : vector<2x128xf32> to vector<2x32xf32>
    %cst_36 = arith.constant 2.000000e+00 : f32
    %155 = vector.broadcast %cst_36 : f32 to vector<2x32xf32>
    %156 = arith.mulf %155, %154 : vector<2x32xf32>
    %cst_37 = arith.constant 1.000000e+00 : f32
    %157 = vector.broadcast %cst_37 : f32 to vector<2x32xf32>
    %158 = arith.subf %156, %157 : vector<2x32xf32>
    %159 = vector.extract_strided_slice %151 {offsets = [0, 96], sizes = [2, 32], strides = [1, 1]} : vector<2x128xf32> to vector<2x32xf32>
    %160 = arith.mulf %153, %140 : vector<2x32xf32>
    %161 = arith.mulf %152, %158 : vector<2x32xf32>
    %162 = arith.addf %160, %161 : vector<2x32xf32>
    %163 = math.tanh %162 : vector<2x32xf32>
    %164 = arith.mulf %159, %163 : vector<2x32xf32>
    %165 = vector.extract_strided_slice %7 {offsets = [0, 7, 0], sizes = [2, 1, 128], strides = [1, 1, 1]} : vector<2x8x128xf32> to vector<2x1x128xf32>
    %166 = vector.shape_cast %165 : vector<2x1x128xf32> to vector<2x128xf32>
    %cst_38 = arith.constant dense<0.000000e+00> : vector<2x128xf32>
    %167 = tpu.matmul %164, %8, %cst_38 {dimension_numbers = #tpu.dot_dimension_numbers<[1], [0], [0], [1], [0, 0, 1, 1], [], []>} : vector<2x32xf32>, vector<32x128xf32>, vector<2x128xf32> -> vector<2x128xf32>
    %168 = arith.addf %166, %167 : vector<2x128xf32>
    %169 = arith.negf %168 : vector<2x128xf32>
    %170 = math.exp %169 : vector<2x128xf32>
    %cst_39 = arith.constant 1.000000e+00 : f32
    %171 = vector.broadcast %cst_39 : f32 to vector<2x128xf32>
    %172 = arith.addf %171, %170 : vector<2x128xf32>
    %173 = arith.divf %171, %172 : vector<2x128xf32>
    %174 = vector.extract_strided_slice %173 {offsets = [0, 0], sizes = [2, 32], strides = [1, 1]} : vector<2x128xf32> to vector<2x32xf32>
    %175 = vector.extract_strided_slice %173 {offsets = [0, 32], sizes = [2, 32], strides = [1, 1]} : vector<2x128xf32> to vector<2x32xf32>
    %176 = vector.extract_strided_slice %173 {offsets = [0, 64], sizes = [2, 32], strides = [1, 1]} : vector<2x128xf32> to vector<2x32xf32>
    %cst_40 = arith.constant 2.000000e+00 : f32
    %177 = vector.broadcast %cst_40 : f32 to vector<2x32xf32>
    %178 = arith.mulf %177, %176 : vector<2x32xf32>
    %cst_41 = arith.constant 1.000000e+00 : f32
    %179 = vector.broadcast %cst_41 : f32 to vector<2x32xf32>
    %180 = arith.subf %178, %179 : vector<2x32xf32>
    %181 = vector.extract_strided_slice %173 {offsets = [0, 96], sizes = [2, 32], strides = [1, 1]} : vector<2x128xf32> to vector<2x32xf32>
    %182 = arith.mulf %175, %162 : vector<2x32xf32>
    %183 = arith.mulf %174, %180 : vector<2x32xf32>
    %184 = arith.addf %182, %183 : vector<2x32xf32>
    %185 = math.tanh %184 : vector<2x32xf32>
    %186 = arith.mulf %181, %185 : vector<2x32xf32>
    %c0_42 = arith.constant 0 : index
    %c0_43 = arith.constant 0 : index
    %187 = vector.load %arg4[%c0_42, %c0_43] : memref<1x32xf32, #tpu.memory_space<vmem>>, vector<1x32xf32>
    %188 = vector.shape_cast %187 : vector<1x32xf32> to vector<32xf32>
    %189 = vector.shape_cast %188 : vector<32xf32> to vector<1x32xf32>
    %190 = vector.broadcast %189 : vector<1x32xf32> to vector<2x32xf32>
    %191 = arith.mulf %186, %190 : vector<2x32xf32>
    %cst_44 = arith.constant dense<0.000000e+00> : vector<2xf32>
    %192 = vector.multi_reduction <add>, %191, %cst_44 [1] : vector<2x32xf32> to vector<2xf32>
    %193 = vector.shape_cast %192 : vector<2xf32> to vector<2x1xf32>
    %c0_45 = arith.constant 0 : index
    %194 = memref.load %arg5[%c0_45] : memref<1xf32, #tpu.memory_space<smem>>
    %195 = vector.broadcast %194 : f32 to vector<2x1xf32>
    %196 = arith.addf %193, %195 : vector<2x1xf32>
    %c0_46 = arith.constant 0 : index
    %c0_47 = arith.constant 0 : index
    %197 = vector.load %arg6[%c0_46, %c0_47] : memref<2x1xf32, #tpu.memory_space<vmem>>, vector<2x1xf32>
    tpu.vector_store %arg6[%c0_46, %c0_47], %196 {strides = array<i32>} : memref<2x1xf32, #tpu.memory_space<vmem>>, vector<2x1xf32>,
    return
  }
}

</mosaic_0001>

<llo_original>
// kernel: tpu_custom_call.1
$region0: #{tpu_custom_call.1}
  #allocation0 [shape = 'u32[]', space=smem, size = 0x4, offset = 0x4, fixed_abs, tag = 'smem constant byte address 0x4 - core index']
  #allocation1 [shape = 'u32[144,128]{1,0:T(1,128)}', space=vmem, size = 0x12000, scoped, tag = 'internal scratch']
  #allocation2 [shape = 'f32[1]{0:T(128)S(6)}', space=smem, size = 0x200, scoped, tag = 'scoped memory for tpu_custom_call.1']
  %s0 = inlined_call_operand.vmem [shape: f32[2,8,4], index: 0, kind: input, shape index: {}]
  %s1 = inlined_call_operand.hbm [shape: f32[4,128], index: 1, kind: input, shape index: {}]
  %s2 = inlined_call_operand.vmem [shape: f32[32,128], index: 2, kind: input, shape index: {}]
  %s3 = inlined_call_operand.vmem [shape: f32[1,128], index: 3, kind: input, shape index: {}]
  %s4 = inlined_call_operand.vmem [shape: f32[1,32], index: 4, kind: input, shape index: {}]
  %s5 = inlined_call_operand.<no memory space> [shape: f32[1], index: 5, kind: input, shape index: {}]
  %s6 = inlined_call_operand.vmem [shape: f32[2,1], index: 6, kind: output, shape index: {}]
  %s7 = sld [smem:[#allocation0]]
  $region38: #{tpu_custom_call.1} parent=0
    _
  %s9 = ssub.s32 1, %s7
  %s10 = scalar_select 0, %s9, %s7
  %11 = sst [smem:[#allocation2]] %s5
  $region1: #{tpu_custom_call.1} parent=0
    #allocation3 [shape = 'u8[2048]{0}', space=vmem, size = 0x800, scoped, tag = 'input window, operand 1, single buffered']
    #allocation4 [shape = 's32[1]{0}', space=sflag, size = 0x4, scoped, tag = 'scoped memory for tpu_custom_call.1']
    %12 = vsyncpa [#allocation4], 0
    // Predicated region
    $region2: #{tpu_custom_call.1} parent=1 // pred_check
      _
    $region3: #{tpu_custom_call.1} parent=1 // pred_check_branch
      %14 = sbr.rel (0) target = $region5
    $region4: #{tpu_custom_call.1} parent=1 // pred_region
      _
    $region5: #{tpu_custom_call.1} parent=1 // pred_fallthru
      _
    // Predicated region
    $region6: #{tpu_custom_call.1} parent=1 // pred_check
      _
    $region7: #{tpu_custom_call.1} parent=1 // pred_check_branch
      %16 = sbr.rel (0) target = $region9
    $region8: #{tpu_custom_call.1} parent=1 // pred_region
      %s18 = ssub.s32 64, 64
      %19 = vsyncadd [#allocation4], %s18
      %s21 = sshll.u32 [#allocation3], 4
      %s22 = int_to_ptr.vmem [resolvable:$true] %s21
      %24 = dma.hbm_to_vmem [thread:$0]  %s1, 64, %s22, [#allocation4]
    $region9: #{tpu_custom_call.1} parent=1 // pred_fallthru
      _
    // Predicated region
    $region10: #{tpu_custom_call.1} parent=1 // pred_check
      _
    $region11: #{tpu_custom_call.1} parent=1 // pred_check_branch
      %26 = sbr.rel (0) target = $region13
    $region12: #{tpu_custom_call.1} parent=1 // pred_region
      _
    $region13: #{tpu_custom_call.1} parent=1 // pred_fallthru
      _
    // Predicated region
    $region14: #{tpu_custom_call.1} parent=1 // pred_check
      _
    $region15: #{tpu_custom_call.1} parent=1 // pred_check_branch
      %28 = sbr.rel (0) target = $region17
    $region16: #{tpu_custom_call.1} parent=1 // pred_region
      _
    $region17: #{tpu_custom_call.1} parent=1 // pred_fallthru
      _
    // Predicated region
    $region18: #{tpu_custom_call.1} parent=1 // pred_check
      _
    $region19: #{tpu_custom_call.1} parent=1 // pred_check_branch
      %30 = sbr.rel (0) target = $region21
    $region20: #{tpu_custom_call.1} parent=1 // pred_region
      _
    $region21: #{tpu_custom_call.1} parent=1 // pred_fallthru
      _
    // Predicated region
    $region22: #{tpu_custom_call.1} parent=1 // pred_check
      _
    $region23: #{tpu_custom_call.1} parent=1 // pred_check_branch
      %32 = sbr.rel (0) target = $region25
    $region24: #{tpu_custom_call.1} parent=1 // pred_region
      _
    $region25: #{tpu_custom_call.1} parent=1 // pred_fallthru
      _
    // Predicated region
    $region26: #{tpu_custom_call.1} parent=1 // pred_check
      _
    $region27: #{tpu_custom_call.1} parent=1 // pred_check_branch
      %34 = sbr.rel (0) target = $region29
    $region28: #{tpu_custom_call.1} parent=1 // pred_region
      %35 = dma.done [#allocation4], 64
    $region29: #{tpu_custom_call.1} parent=1 // pred_fallthru
      _
    %v36 = vld [vmem:[%s0] sm:$0xff]
    %v37 = vld [vmem:[%s0 + $0x8] sm:$0xff]
    %v38 = vld [vmem:[#allocation3] sm:$0xf]
    %v39 = vld [vmem:[%s3] sm:$0x1]
    %v41 = vlaneseq
    %v42 = vshrl.u32 %v41, 7
    %v43 = vsub.s32 0, %v42
    %v44 = vrot.slane %v39, %v43
    %vm46 = vcmask 31744
    %v48 = vsel %vm46, %v36, 0
    %v51 = vsel %vm46, %v37, 0
    %vm53 = vcmask 1043456
    %v55 = vsel %vm53, %v38, 0
    %57 = vmatprep.subr.mxu0 0.0
    %58 = vmatpush1.msra.mxu0 %v55
    %59 = vmatprep.subr.mxu0 0.0
    %60 = vmatpush1.msra.mxu0 0.0
    %61 = vmatprep.subr.mxu0 0.0
    %62 = vmatpush1.msra.mxu0 0.0
    %63 = vmatprep.subr.mxu0 0.0
    %64 = vmatpush1.msra.mxu0 0.0
    %65 = vmatprep.subr.mxu0 0.0
    %66 = vmatpush1.msra.mxu0 0.0
    %67 = vmatprep.subr.mxu0 0.0
    %68 = vmatpush1.msra.mxu0 0.0
    %69 = vmatprep.subr.mxu0 0.0
    %70 = vmatpush1.msra.mxu0 0.0
    %71 = vmatprep.subr.mxu0 0.0
    %72 = vmatpush1.msra.mxu0 0.0
    %73 = vmatprep.subr.mxu0 0.0
    %74 = vmatpush1.msra.mxu0 0.0
    %75 = vmatprep.subr.mxu0 0.0
    %76 = vmatpush1.msra.mxu0 0.0
    %77 = vmatprep.subr.mxu0 0.0
    %78 = vmatpush1.msra.mxu0 0.0
    %79 = vmatprep.subr.mxu0 0.0
    %80 = vmatpush1.msra.mxu0 0.0
    %81 = vmatprep.subr.mxu0 0.0
    %82 = vmatpush1.msra.mxu0 0.0
    %83 = vmatprep.subr.mxu0 0.0
    %84 = vmatpush1.msra.mxu0 0.0
    %85 = vmatprep.subr.mxu0 0.0
    %86 = vmatpush1.msra.mxu0 0.0
    %87 = vmatprep.subr.mxu0 0.0
    %88 = vmatpush1.msra.mxu0 0.0
    %89 = vmatprep.subr.mxu0 0.0
    %90 = vmatpush1.msra.mxu0 0.0
    %91 = vmatprep.subr.mxu0 0.0
    %92 = vmatpush1.msra.mxu0 0.0
    %93 = vmatprep.subr.mxu0 0.0
    %94 = vmatpush1.msra.mxu0 0.0
    %95 = vmatprep.subr.mxu0 0.0
    %96 = vmatpush1.msra.mxu0 0.0
    %97 = vmatprep.subr.mxu0 0.0
    %98 = vmatpush1.msra.mxu0 0.0
    %99 = vmatprep.subr.mxu0 0.0
    %100 = vmatpush1.msra.mxu0 0.0
    %101 = vmatprep.subr.mxu0 0.0
    %102 = vmatpush1.msra.mxu0 0.0
    %103 = vmatprep.subr.mxu0 0.0
    %104 = vmatpush1.msra.mxu0 0.0
    %105 = vmatprep.subr.mxu0 0.0
    %106 = vmatpush1.msra.mxu0 0.0
    %107 = vmatprep.subr.mxu0 0.0
    %108 = vmatpush1.msra.mxu0 0.0
    %109 = vmatprep.subr.mxu0 0.0
    %110 = vmatpush1.msra.mxu0 0.0
    %111 = vmatprep.subr.mxu0 0.0
    %112 = vmatpush1.msra.mxu0 0.0
    %113 = vmatprep.subr.mxu0 0.0
    %114 = vmatpush1.msra.mxu0 0.0
    %115 = vmatprep.subr.mxu0 0.0
    %116 = vmatpush1.msra.mxu0 0.0
    %117 = vmatprep.subr.mxu0 0.0
    %118 = vmatpush1.msra.mxu0 0.0
    %119 = vmatprep.subr.mxu0 0.0
    %120 = vmatpush1.msra.mxu0 0.0
    %121 = vmatprep.mubr.f32.mxu0 0.0
    %122 = vmatmul.mubr.f32.gmra.mrb[0].mxu0 %v48
    %v123 = vpop.f32.mrb[0].mxu0
    %v124 = vadd.f32 %v44, %v123
    %v125 = vpop.f32.mrb[0].mxu0
    %126 = vmatprep.mubr.f32.mxu0 0.0
    %127 = vmatmul.mubr.f32.gmra.mrb[0].mxu0 %v51
    %v128 = vpop.f32.mrb[0].mxu0
    %v129 = vadd.f32 %v44, %v128
    %v130 = vpop.f32.mrb[0].mxu0
    %131 = vdwg.mxu0
    %v132 = vld [vmem:[%s2] sm:$0xff]
    %v133 = vld [vmem:[%s2 + $0x8] sm:$0xff]
    %v134 = vld [vmem:[%s2 + $0x10] sm:$0xff]
    %v135 = vld [vmem:[%s2 + $0x18] sm:$0xff]
    %vm136 = vcmask 261120
    %v138 = vsel %vm136, 0.0, 0
    %140 = vmatprep.subr.mxu0 0.0
    %141 = vmatpush1.msra.mxu0 %v132
    %142 = vmatprep.subr.mxu0 0.0
    %143 = vmatpush1.msra.mxu0 %v133
    %144 = vmatprep.subr.mxu0 0.0
    %145 = vmatpush1.msra.mxu0 %v134
    %146 = vmatprep.subr.mxu0 0.0
    %147 = vmatpush1.msra.mxu0 %v135
    %148 = vmatprep.subr.mxu0 0.0
    %149 = vmatpush1.msra.mxu0 0.0
    %150 = vmatprep.subr.mxu0 0.0
    %151 = vmatpush1.msra.mxu0 0.0
    %152 = vmatprep.subr.mxu0 0.0
    %153 = vmatpush1.msra.mxu0 0.0
    %154 = vmatprep.subr.mxu0 0.0
    %155 = vmatpush1.msra.mxu0 0.0
    %156 = vmatprep.subr.mxu0 0.0
    %157 = vmatpush1.msra.mxu0 0.0
    %158 = vmatprep.subr.mxu0 0.0
    %159 = vmatpush1.msra.mxu0 0.0
    %160 = vmatprep.subr.mxu0 0.0
    %161 = vmatpush1.msra.mxu0 0.0
    %162 = vmatprep.subr.mxu0 0.0
    %163 = vmatpush1.msra.mxu0 0.0
    %164 = vmatprep.subr.mxu0 0.0
    %165 = vmatpush1.msra.mxu0 0.0
    %166 = vmatprep.subr.mxu0 0.0
    %167 = vmatpush1.msra.mxu0 0.0
    %168 = vmatprep.subr.mxu0 0.0
    %169 = vmatpush1.msra.mxu0 0.0
    %170 = vmatprep.subr.mxu0 0.0
    %171 = vmatpush1.msra.mxu0 0.0
    %172 = vmatprep.subr.mxu0 0.0
    %173 = vmatpush1.msra.mxu0 0.0
    %174 = vmatprep.subr.mxu0 0.0
    %175 = vmatpush1.msra.mxu0 0.0
    %176 = vmatprep.subr.mxu0 0.0
    %177 = vmatpush1.msra.mxu0 0.0
    %178 = vmatprep.subr.mxu0 0.0
    %179 = vmatpush1.msra.mxu0 0.0
    %180 = vmatprep.subr.mxu0 0.0
    %181 = vmatpush1.msra.mxu0 0.0
    %182 = vmatprep.subr.mxu0 0.0
    %183 = vmatpush1.msra.mxu0 0.0
    %184 = vmatprep.subr.mxu0 0.0
    %185 = vmatpush1.msra.mxu0 0.0
    %186 = vmatprep.subr.mxu0 0.0
    %187 = vmatpush1.msra.mxu0 0.0
    %188 = vmatprep.subr.mxu0 0.0
    %189 = vmatpush1.msra.mxu0 0.0
    %190 = vmatprep.subr.mxu0 0.0
    %191 = vmatpush1.msra.mxu0 0.0
    %192 = vmatprep.subr.mxu0 0.0
    %193 = vmatpush1.msra.mxu0 0.0
    %194 = vmatprep.subr.mxu0 0.0
    %195 = vmatpush1.msra.mxu0 0.0
    %196 = vmatprep.subr.mxu0 0.0
    %197 = vmatpush1.msra.mxu0 0.0
    %198 = vmatprep.subr.mxu0 0.0
    %199 = vmatpush1.msra.mxu0 0.0
    %200 = vmatprep.subr.mxu0 0.0
    %201 = vmatpush1.msra.mxu0 0.0
    %202 = vmatprep.subr.mxu0 0.0
    %203 = vmatpush1.msra.mxu0 0.0
    %204 = vmatprep.mubr.f32.mxu0 0.0
    %205 = vmatmul.mubr.f32.gmra.mrb[0].mxu0 %v138
    %v206 = vpop.f32.mrb[0].mxu0
    %v207 = vadd.f32 0.0, %v206
    %v208 = vpop.f32.mrb[0].mxu0
    %209 = vdwg.mxu0
    %v211 = vrot.slane %v207, 1
    %v214 = vadd.f32 %v124, %v207
    %v215 = vadd.f32 %v129, %v211
    %v216 = vxor.u32 %v214, 2147483648
    %v217 = vxor.u32 %v215, 2147483648
    %v218 = vmul.f32 %v216, 1.442695
    %v219 = vpow.pop %v218
    %v220 = vmul.f32 %v217, 1.442695
    %v221 = vpow.pop %v220
    %v222 = vadd.f32 %v219, 1.0
    %v223 = vadd.f32 %v221, 1.0
    %v224 = vrcp.pop %v222
    %v225 = vmul.f32 1.0, %v224
    %v226 = vrcp.pop %v223
    %v227 = vmul.f32 1.0, %v226
    %v228 = vmul.f32 %v225, 2.0
    %v229 = vmul.f32 %v227, 2.0
    %v230 = vsub.f32 %v228, 1.0
    %v231 = vsub.f32 %v229, 1.0
    %v232 = vmul.f32 %v225, 0.0
    %v233 = vmul.f32 %v227, 0.0
    %236 = vrot.lane.b32.xlu0 %v230, 64
    %v237 = vpop.permute.xlu0 %236
    %238 = vrot.lane.b32.xlu0 %v231, 64
    %v239 = vpop.permute.xlu0 %238
    %v242 = vmul.f32 %v225, %v237
    %v243 = vmul.f32 %v227, %v239
    %246 = vrot.lane.b32.xlu0 %v242, 32
    %v247 = vpop.permute.xlu0 %246
    %248 = vrot.lane.b32.xlu0 %v243, 32
    %v249 = vpop.permute.xlu0 %248
    %v252 = vadd.f32 %v232, %v247
    %v253 = vadd.f32 %v233, %v249
    %v254 = vtanh.pop %v252
    %v255 = vtanh.pop %v253
    %258 = vrot.lane.b32.xlu0 %v254, 64
    %v259 = vpop.permute.xlu0 %258
    %260 = vrot.lane.b32.xlu0 %v255, 64
    %v261 = vpop.permute.xlu0 %260
    %v264 = vmul.f32 %v225, %v259
    %v265 = vmul.f32 %v227, %v261
    %v268 = vrot.slane %v265, 7
    %vm269 = vcmask 1041409
    %v270 = vsel %vm269, %v268, %v264
    %271 = vrot.lane.b32.xlu0 %v270, 32
    %v272 = vpop.permute.xlu0 %271
    %v273 = vsel %vm136, %v272, 0
    %275 = vmatprep.subr.mxu0 0.0
    %276 = vmatpush1.msra.mxu0 %v132
    %277 = vmatprep.subr.mxu0 0.0
    %278 = vmatpush1.msra.mxu0 %v133
    %279 = vmatprep.subr.mxu0 0.0
    %280 = vmatpush1.msra.mxu0 %v134
    %281 = vmatprep.subr.mxu0 0.0
    %282 = vmatpush1.msra.mxu0 %v135
    %283 = vmatprep.subr.mxu0 0.0
    %284 = vmatpush1.msra.mxu0 0.0
    %285 = vmatprep.subr.mxu0 0.0
    %286 = vmatpush1.msra.mxu0 0.0
    %287 = vmatprep.subr.mxu0 0.0
    %288 = vmatpush1.msra.mxu0 0.0
    %289 = vmatprep.subr.mxu0 0.0
    %290 = vmatpush1.msra.mxu0 0.0
    %291 = vmatprep.subr.mxu0 0.0
    %292 = vmatpush1.msra.mxu0 0.0
    %293 = vmatprep.subr.mxu0 0.0
    %294 = vmatpush1.msra.mxu0 0.0
    %295 = vmatprep.subr.mxu0 0.0
    %296 = vmatpush1.msra.mxu0 0.0
    %297 = vmatprep.subr.mxu0 0.0
    %298 = vmatpush1.msra.mxu0 0.0
    %299 = vmatprep.subr.mxu0 0.0
    %300 = vmatpush1.msra.mxu0 0.0
    %301 = vmatprep.subr.mxu0 0.0
    %302 = vmatpush1.msra.mxu0 0.0
    %303 = vmatprep.subr.mxu0 0.0
    %304 = vmatpush1.msra.mxu0 0.0
    %305 = vmatprep.subr.mxu0 0.0
    %306 = vmatpush1.msra.mxu0 0.0
    %307 = vmatprep.subr.mxu0 0.0
    %308 = vmatpush1.msra.mxu0 0.0
    %309 = vmatprep.subr.mxu0 0.0
    %310 = vmatpush1.msra.mxu0 0.0
    %311 = vmatprep.subr.mxu0 0.0
    %312 = vmatpush1.msra.mxu0 0.0
    %313 = vmatprep.subr.mxu0 0.0
    %314 = vmatpush1.msra.mxu0 0.0
    %315 = vmatprep.subr.mxu0 0.0
    %316 = vmatpush1.msra.mxu0 0.0
    %317 = vmatprep.subr.mxu0 0.0
    %318 = vmatpush1.msra.mxu0 0.0
    %319 = vmatprep.subr.mxu0 0.0
    %320 = vmatpush1.msra.mxu0 0.0
    %321 = vmatprep.subr.mxu0 0.0
    %322 = vmatpush1.msra.mxu0 0.0
    %323 = vmatprep.subr.mxu0 0.0
    %324 = vmatpush1.msra.mxu0 0.0
    %325 = vmatprep.subr.mxu0 0.0
    %326 = vmatpush1.msra.mxu0 0.0
    %327 = vmatprep.subr.mxu0 0.0
    %328 = vmatpush1.msra.mxu0 0.0
    %329 = vmatprep.subr.mxu0 0.0
    %330 = vmatpush1.msra.mxu0 0.0
    %331 = vmatprep.subr.mxu0 0.0
    %332 = vmatpush1.msra.mxu0 0.0
    %333 = vmatprep.subr.mxu0 0.0
    %334 = vmatpush1.msra.mxu0 0.0
    %335 = vmatprep.subr.mxu0 0.0
    %336 = vmatpush1.msra.mxu0 0.0
    %337 = vmatprep.subr.mxu0 0.0
    %338 = vmatpush1.msra.mxu0 0.0
    %339 = vmatprep.mubr.f32.mxu0 0.0
    %340 = vmatmul.mubr.f32.gmra.mrb[0].mxu0 %v273
    %v341 = vpop.f32.mrb[0].mxu0
    %v342 = vadd.f32 0.0, %v341
    %v343 = vpop.f32.mrb[0].mxu0
    %344 = vdwg.mxu0
    %v346 = vrot.slane %v342, 7
    %v349 = vadd.f32 %v124, %v346
    %v350 = vadd.f32 %v129, %v342
    %v351 = vxor.u32 %v349, 2147483648
    %v352 = vxor.u32 %v350, 2147483648
    %v353 = vmul.f32 %v351, 1.442695
    %v354 = vpow.pop %v353
    %v355 = vmul.f32 %v352, 1.442695
    %v356 = vpow.pop %v355
    %v357 = vadd.f32 %v354, 1.0
    %v358 = vadd.f32 %v356, 1.0
    %v359 = vrcp.pop %v357
    %v360 = vmul.f32 1.0, %v359
    %v361 = vrcp.pop %v358
    %v362 = vmul.f32 1.0, %v361
    %v363 = vmul.f32 %v360, 2.0
    %v364 = vmul.f32 %v362, 2.0
    %v365 = vsub.f32 %v363, 1.0
    %v366 = vsub.f32 %v364, 1.0
    %v369 = vrot.slane %v252, 7
    %v370 = vrot.slane %v253, 7
    %v373 = vmul.f32 %v360, %v369
    %v374 = vmul.f32 %v362, %v370
    %377 = vrot.lane.b32.xlu0 %v365, 64
    %v378 = vpop.permute.xlu0 %377
    %379 = vrot.lane.b32.xlu0 %v366, 64
    %v380 = vpop.permute.xlu0 %379
    %v383 = vmul.f32 %v360, %v378
    %v384 = vmul.f32 %v362, %v380
    %387 = vrot.lane.b32.xlu0 %v383, 32
    %v388 = vpop.permute.xlu0 %387
    %389 = vrot.lane.b32.xlu0 %v384, 32
    %v390 = vpop.permute.xlu0 %389
    %v393 = vadd.f32 %v373, %v388
    %v394 = vadd.f32 %v374, %v390
    %v395 = vtanh.pop %v393
    %v396 = vtanh.pop %v394
    %399 = vrot.lane.b32.xlu0 %v395, 64
    %v400 = vpop.permute.xlu0 %399
    %401 = vrot.lane.b32.xlu0 %v396, 64
    %v402 = vpop.permute.xlu0 %401
    %v405 = vmul.f32 %v360, %v400
    %v406 = vmul.f32 %v362, %v402
    %v409 = vrot.slane %v405, 1
    %v410 = vsel %vm269, %v406, %v409
    %411 = vrot.lane.b32.xlu0 %v410, 32
    %v412 = vpop.permute.xlu0 %411
    %v413 = vsel %vm136, %v412, 0
    %415 = vmatprep.subr.mxu0 0.0
    %416 = vmatpush1.msra.mxu0 %v132
    %417 = vmatprep.subr.mxu0 0.0
    %418 = vmatpush1.msra.mxu0 %v133
    %419 = vmatprep.subr.mxu0 0.0
    %420 = vmatpush1.msra.mxu0 %v134
    %421 = vmatprep.subr.mxu0 0.0
    %422 = vmatpush1.msra.mxu0 %v135
    %423 = vmatprep.subr.mxu0 0.0
    %424 = vmatpush1.msra.mxu0 0.0
    %425 = vmatprep.subr.mxu0 0.0
    %426 = vmatpush1.msra.mxu0 0.0
    %427 = vmatprep.subr.mxu0 0.0
    %428 = vmatpush1.msra.mxu0 0.0
    %429 = vmatprep.subr.mxu0 0.0
    %430 = vmatpush1.msra.mxu0 0.0
    %431 = vmatprep.subr.mxu0 0.0
    %432 = vmatpush1.msra.mxu0 0.0
    %433 = vmatprep.subr.mxu0 0.0
    %434 = vmatpush1.msra.mxu0 0.0
    %435 = vmatprep.subr.mxu0 0.0
    %436 = vmatpush1.msra.mxu0 0.0
    %437 = vmatprep.subr.mxu0 0.0
    %438 = vmatpush1.msra.mxu0 0.0
    %439 = vmatprep.subr.mxu0 0.0
    %440 = vmatpush1.msra.mxu0 0.0
    %441 = vmatprep.subr.mxu0 0.0
    %442 = vmatpush1.msra.mxu0 0.0
    %443 = vmatprep.subr.mxu0 0.0
    %444 = vmatpush1.msra.mxu0 0.0
    %445 = vmatprep.subr.mxu0 0.0
    %446 = vmatpush1.msra.mxu0 0.0
    %447 = vmatprep.subr.mxu0 0.0
    %448 = vmatpush1.msra.mxu0 0.0
    %449 = vmatprep.subr.mxu0 0.0
    %450 = vmatpush1.msra.mxu0 0.0
    %451 = vmatprep.subr.mxu0 0.0
    %452 = vmatpush1.msra.mxu0 0.0
    %453 = vmatprep.subr.mxu0 0.0
    %454 = vmatpush1.msra.mxu0 0.0
    %455 = vmatprep.subr.mxu0 0.0
    %456 = vmatpush1.msra.mxu0 0.0
    %457 = vmatprep.subr.mxu0 0.0
    %458 = vmatpush1.msra.mxu0 0.0
    %459 = vmatprep.subr.mxu0 0.0
    %460 = vmatpush1.msra.mxu0 0.0
    %461 = vmatprep.subr.mxu0 0.0
    %462 = vmatpush1.msra.mxu0 0.0
    %463 = vmatprep.subr.mxu0 0.0
    %464 = vmatpush1.msra.mxu0 0.0
    %465 = vmatprep.subr.mxu0 0.0
    %466 = vmatpush1.msra.mxu0 0.0
    %467 = vmatprep.subr.mxu0 0.0
    %468 = vmatpush1.msra.mxu0 0.0
    %469 = vmatprep.subr.mxu0 0.0
    %470 = vmatpush1.msra.mxu0 0.0
    %471 = vmatprep.subr.mxu0 0.0
    %472 = vmatpush1.msra.mxu0 0.0
    %473 = vmatprep.subr.mxu0 0.0
    %474 = vmatpush1.msra.mxu0 0.0
    %475 = vmatprep.subr.mxu0 0.0
    %476 = vmatpush1.msra.mxu0 0.0
    %477 = vmatprep.subr.mxu0 0.0
    %478 = vmatpush1.msra.mxu0 0.0
    %479 = vmatprep.mubr.f32.mxu0 0.0
    %480 = vmatmul.mubr.f32.gmra.mrb[0].mxu0 %v413
    %v481 = vpop.f32.mrb[0].mxu0
    %v482 = vadd.f32 0.0, %v481
    %v483 = vpop.f32.mrb[0].mxu0
    %484 = vdwg.mxu0
    %v486 = vrot.slane %v482, 6
    %v487 = vrot.slane %v482, 7
    %v490 = vadd.f32 %v124, %v486
    %v491 = vadd.f32 %v129, %v487
    %v492 = vxor.u32 %v490, 2147483648
    %v493 = vxor.u32 %v491, 2147483648
    %v494 = vmul.f32 %v492, 1.442695
    %v495 = vpow.pop %v494
    %v496 = vmul.f32 %v493, 1.442695
    %v497 = vpow.pop %v496
    %v498 = vadd.f32 %v495, 1.0
    %v499 = vadd.f32 %v497, 1.0
    %v500 = vrcp.pop %v498
    %v501 = vmul.f32 1.0, %v500
    %v502 = vrcp.pop %v499
    %v503 = vmul.f32 1.0, %v502
    %v504 = vmul.f32 %v501, 2.0
    %v505 = vmul.f32 %v503, 2.0
    %v506 = vsub.f32 %v504, 1.0
    %v507 = vsub.f32 %v505, 1.0
    %v510 = vrot.slane %v393, 7
    %v511 = vrot.slane %v394, 7
    %v514 = vmul.f32 %v501, %v510
    %v515 = vmul.f32 %v503, %v511
    %518 = vrot.lane.b32.xlu0 %v506, 64
    %v519 = vpop.permute.xlu0 %518
    %520 = vrot.lane.b32.xlu0 %v507, 64
    %v521 = vpop.permute.xlu0 %520
    %v524 = vmul.f32 %v501, %v519
    %v525 = vmul.f32 %v503, %v521
    %528 = vrot.lane.b32.xlu0 %v524, 32
    %v529 = vpop.permute.xlu0 %528
    %530 = vrot.lane.b32.xlu0 %v525, 32
    %v531 = vpop.permute.xlu0 %530
    %v534 = vadd.f32 %v514, %v529
    %v535 = vadd.f32 %v515, %v531
    %v536 = vtanh.pop %v534
    %v537 = vtanh.pop %v535
    %540 = vrot.lane.b32.xlu0 %v536, 64
    %v541 = vpop.permute.xlu0 %540
    %542 = vrot.lane.b32.xlu0 %v537, 64
    %v543 = vpop.permute.xlu0 %542
    %v546 = vmul.f32 %v501, %v541
    %v547 = vmul.f32 %v503, %v543
    %v550 = vrot.slane %v546, 2
    %v551 = vrot.slane %v547, 1
    %v552 = vsel %vm269, %v551, %v550
    %553 = vrot.lane.b32.xlu0 %v552, 32
    %v554 = vpop.permute.xlu0 %553
    %v555 = vsel %vm136, %v554, 0
    %557 = vmatprep.subr.mxu0 0.0
    %558 = vmatpush1.msra.mxu0 %v132
    %559 = vmatprep.subr.mxu0 0.0
    %560 = vmatpush1.msra.mxu0 %v133
    %561 = vmatprep.subr.mxu0 0.0
    %562 = vmatpush1.msra.mxu0 %v134
    %563 = vmatprep.subr.mxu0 0.0
    %564 = vmatpush1.msra.mxu0 %v135
    %565 = vmatprep.subr.mxu0 0.0
    %566 = vmatpush1.msra.mxu0 0.0
    %567 = vmatprep.subr.mxu0 0.0
    %568 = vmatpush1.msra.mxu0 0.0
    %569 = vmatprep.subr.mxu0 0.0
    %570 = vmatpush1.msra.mxu0 0.0
    %571 = vmatprep.subr.mxu0 0.0
    %572 = vmatpush1.msra.mxu0 0.0
    %573 = vmatprep.subr.mxu0 0.0
    %574 = vmatpush1.msra.mxu0 0.0
    %575 = vmatprep.subr.mxu0 0.0
    %576 = vmatpush1.msra.mxu0 0.0
    %577 = vmatprep.subr.mxu0 0.0
    %578 = vmatpush1.msra.mxu0 0.0
    %579 = vmatprep.subr.mxu0 0.0
    %580 = vmatpush1.msra.mxu0 0.0
    %581 = vmatprep.subr.mxu0 0.0
    %582 = vmatpush1.msra.mxu0 0.0
    %583 = vmatprep.subr.mxu0 0.0
    %584 = vmatpush1.msra.mxu0 0.0
    %585 = vmatprep.subr.mxu0 0.0
    %586 = vmatpush1.msra.mxu0 0.0
    %587 = vmatprep.subr.mxu0 0.0
    %588 = vmatpush1.msra.mxu0 0.0
    %589 = vmatprep.subr.mxu0 0.0
    %590 = vmatpush1.msra.mxu0 0.0
    %591 = vmatprep.subr.mxu0 0.0
    %592 = vmatpush1.msra.mxu0 0.0
    %593 = vmatprep.subr.mxu0 0.0
    %594 = vmatpush1.msra.mxu0 0.0
    %595 = vmatprep.subr.mxu0 0.0
    %596 = vmatpush1.msra.mxu0 0.0
    %597 = vmatprep.subr.mxu0 0.0
    %598 = vmatpush1.msra.mxu0 0.0
    %599 = vmatprep.subr.mxu0 0.0
    %600 = vmatpush1.msra.mxu0 0.0
    %601 = vmatprep.subr.mxu0 0.0
    %602 = vmatpush1.msra.mxu0 0.0
    %603 = vmatprep.subr.mxu0 0.0
    %604 = vmatpush1.msra.mxu0 0.0
    %605 = vmatprep.subr.mxu0 0.0
    %606 = vmatpush1.msra.mxu0 0.0
    %607 = vmatprep.subr.mxu0 0.0
    %608 = vmatpush1.msra.mxu0 0.0
    %609 = vmatprep.subr.mxu0 0.0
    %610 = vmatpush1.msra.mxu0 0.0
    %611 = vmatprep.subr.mxu0 0.0
    %612 = vmatpush1.msra.mxu0 0.0
    %613 = vmatprep.subr.mxu0 0.0
    %614 = vmatpush1.msra.mxu0 0.0
    %615 = vmatprep.subr.mxu0 0.0
    %616 = vmatpush1.msra.mxu0 0.0
    %617 = vmatprep.subr.mxu0 0.0
    %618 = vmatpush1.msra.mxu0 0.0
    %619 = vmatprep.subr.mxu0 0.0
    %620 = vmatpush1.msra.mxu0 0.0
    %621 = vmatprep.mubr.f32.mxu0 0.0
    %622 = vmatmul.mubr.f32.gmra.mrb[0].mxu0 %v555
    %v623 = vpop.f32.mrb[0].mxu0
    %v624 = vadd.f32 0.0, %v623
    %v625 = vpop.f32.mrb[0].mxu0
    %626 = vdwg.mxu0
    %v628 = vrot.slane %v624, 5
    %v629 = vrot.slane %v624, 6
    %v632 = vadd.f32 %v124, %v628
    %v633 = vadd.f32 %v129, %v629
    %v634 = vxor.u32 %v632, 2147483648
    %v635 = vxor.u32 %v633, 2147483648
    %v636 = vmul.f32 %v634, 1.442695
    %v637 = vpow.pop %v636
    %v638 = vmul.f32 %v635, 1.442695
    %v639 = vpow.pop %v638
    %v640 = vadd.f32 %v637, 1.0
    %v641 = vadd.f32 %v639, 1.0
    %v642 = vrcp.pop %v640
    %v643 = vmul.f32 1.0, %v642
    %v644 = vrcp.pop %v641
    %v645 = vmul.f32 1.0, %v644
    %v646 = vmul.f32 %v643, 2.0
    %v647 = vmul.f32 %v645, 2.0
    %v648 = vsub.f32 %v646, 1.0
    %v649 = vsub.f32 %v647, 1.0
    %v652 = vrot.slane %v534, 7
    %v653 = vrot.slane %v535, 7
    %v656 = vmul.f32 %v643, %v652
    %v657 = vmul.f32 %v645, %v653
    %660 = vrot.lane.b32.xlu0 %v648, 64
    %v661 = vpop.permute.xlu0 %660
    %662 = vrot.lane.b32.xlu0 %v649, 64
    %v663 = vpop.permute.xlu0 %662
    %v666 = vmul.f32 %v643, %v661
    %v667 = vmul.f32 %v645, %v663
    %670 = vrot.lane.b32.xlu0 %v666, 32
    %v671 = vpop.permute.xlu0 %670
    %672 = vrot.lane.b32.xlu0 %v667, 32
    %v673 = vpop.permute.xlu0 %672
    %v676 = vadd.f32 %v656, %v671
    %v677 = vadd.f32 %v657, %v673
    %v678 = vtanh.pop %v676
    %v679 = vtanh.pop %v677
    %682 = vrot.lane.b32.xlu0 %v678, 64
    %v683 = vpop.permute.xlu0 %682
    %684 = vrot.lane.b32.xlu0 %v679, 64
    %v685 = vpop.permute.xlu0 %684
    %v688 = vmul.f32 %v643, %v683
    %v689 = vmul.f32 %v645, %v685
    %v692 = vrot.slane %v688, 3
    %v693 = vrot.slane %v689, 2
    %v694 = vsel %vm269, %v693, %v692
    %695 = vrot.lane.b32.xlu0 %v694, 32
    %v696 = vpop.permute.xlu0 %695
    %v697 = vsel %vm136, %v696, 0
    %699 = vmatprep.subr.mxu0 0.0
    %700 = vmatpush1.msra.mxu0 %v132
    %701 = vmatprep.subr.mxu0 0.0
    %702 = vmatpush1.msra.mxu0 %v133
    %703 = vmatprep.subr.mxu0 0.0
    %704 = vmatpush1.msra.mxu0 %v134
    %705 = vmatprep.subr.mxu0 0.0
    %706 = vmatpush1.msra.mxu0 %v135
    %707 = vmatprep.subr.mxu0 0.0
    %708 = vmatpush1.msra.mxu0 0.0
    %709 = vmatprep.subr.mxu0 0.0
    %710 = vmatpush1.msra.mxu0 0.0
    %711 = vmatprep.subr.mxu0 0.0
    %712 = vmatpush1.msra.mxu0 0.0
    %713 = vmatprep.subr.mxu0 0.0
    %714 = vmatpush1.msra.mxu0 0.0
    %715 = vmatprep.subr.mxu0 0.0
    %716 = vmatpush1.msra.mxu0 0.0
    %717 = vmatprep.subr.mxu0 0.0
    %718 = vmatpush1.msra.mxu0 0.0
    %719 = vmatprep.subr.mxu0 0.0
    %720 = vmatpush1.msra.mxu0 0.0
    %721 = vmatprep.subr.mxu0 0.0
    %722 = vmatpush1.msra.mxu0 0.0
    %723 = vmatprep.subr.mxu0 0.0
    %724 = vmatpush1.msra.mxu0 0.0
    %725 = vmatprep.subr.mxu0 0.0
    %726 = vmatpush1.msra.mxu0 0.0
    %727 = vmatprep.subr.mxu0 0.0
    %728 = vmatpush1.msra.mxu0 0.0
    %729 = vmatprep.subr.mxu0 0.0
    %730 = vmatpush1.msra.mxu0 0.0
    %731 = vmatprep.subr.mxu0 0.0
    %732 = vmatpush1.msra.mxu0 0.0
    %733 = vmatprep.subr.mxu0 0.0
    %734 = vmatpush1.msra.mxu0 0.0
    %735 = vmatprep.subr.mxu0 0.0
    %736 = vmatpush1.msra.mxu0 0.0
    %737 = vmatprep.subr.mxu0 0.0
    %738 = vmatpush1.msra.mxu0 0.0
    %739 = vmatprep.subr.mxu0 0.0
    %740 = vmatpush1.msra.mxu0 0.0
    %741 = vmatprep.subr.mxu0 0.0
    %742 = vmatpush1.msra.mxu0 0.0
    %743 = vmatprep.subr.mxu0 0.0
    %744 = vmatpush1.msra.mxu0 0.0
    %745 = vmatprep.subr.mxu0 0.0
    %746 = vmatpush1.msra.mxu0 0.0
    %747 = vmatprep.subr.mxu0 0.0
    %748 = vmatpush1.msra.mxu0 0.0
    %749 = vmatprep.subr.mxu0 0.0
    %750 = vmatpush1.msra.mxu0 0.0
    %751 = vmatprep.subr.mxu0 0.0
    %752 = vmatpush1.msra.mxu0 0.0
    %753 = vmatprep.subr.mxu0 0.0
    %754 = vmatpush1.msra.mxu0 0.0
    %755 = vmatprep.subr.mxu0 0.0
    %756 = vmatpush1.msra.mxu0 0.0
    %757 = vmatprep.subr.mxu0 0.0
    %758 = vmatpush1.msra.mxu0 0.0
    %759 = vmatprep.subr.mxu0 0.0
    %760 = vmatpush1.msra.mxu0 0.0
    %761 = vmatprep.subr.mxu0 0.0
    %762 = vmatpush1.msra.mxu0 0.0
    %763 = vmatprep.mubr.f32.mxu0 0.0
    %764 = vmatmul.mubr.f32.gmra.mrb[0].mxu0 %v697
    %v765 = vpop.f32.mrb[0].mxu0
    %v766 = vadd.f32 0.0, %v765
    %v767 = vpop.f32.mrb[0].mxu0
    %768 = vdwg.mxu0
    %v770 = vrot.slane %v766, 4
    %v771 = vrot.slane %v766, 5
    %v774 = vadd.f32 %v124, %v770
    %v775 = vadd.f32 %v129, %v771
    %v776 = vxor.u32 %v774, 2147483648
    %v777 = vxor.u32 %v775, 2147483648
    %v778 = vmul.f32 %v776, 1.442695
    %v779 = vpow.pop %v778
    %v780 = vmul.f32 %v777, 1.442695
    %v781 = vpow.pop %v780
    %v782 = vadd.f32 %v779, 1.0
    %v783 = vadd.f32 %v781, 1.0
    %v784 = vrcp.pop %v782
    %v785 = vmul.f32 1.0, %v784
    %v786 = vrcp.pop %v783
    %v787 = vmul.f32 1.0, %v786
    %v788 = vmul.f32 %v785, 2.0
    %v789 = vmul.f32 %v787, 2.0
    %v790 = vsub.f32 %v788, 1.0
    %v791 = vsub.f32 %v789, 1.0
    %v794 = vrot.slane %v676, 7
    %v795 = vrot.slane %v677, 7
    %v798 = vmul.f32 %v785, %v794
    %v799 = vmul.f32 %v787, %v795
    %802 = vrot.lane.b32.xlu0 %v790, 64
    %v803 = vpop.permute.xlu0 %802
    %804 = vrot.lane.b32.xlu0 %v791, 64
    %v805 = vpop.permute.xlu0 %804
    %v808 = vmul.f32 %v785, %v803
    %v809 = vmul.f32 %v787, %v805
    %812 = vrot.lane.b32.xlu0 %v808, 32
    %v813 = vpop.permute.xlu0 %812
    %814 = vrot.lane.b32.xlu0 %v809, 32
    %v815 = vpop.permute.xlu0 %814
    %v818 = vadd.f32 %v798, %v813
    %v819 = vadd.f32 %v799, %v815
    %v820 = vtanh.pop %v818
    %v821 = vtanh.pop %v819
    %824 = vrot.lane.b32.xlu0 %v820, 64
    %v825 = vpop.permute.xlu0 %824
    %826 = vrot.lane.b32.xlu0 %v821, 64
    %v827 = vpop.permute.xlu0 %826
    %v830 = vmul.f32 %v785, %v825
    %v831 = vmul.f32 %v787, %v827
    %v834 = vrot.slane %v830, 4
    %v835 = vrot.slane %v831, 3
    %v836 = vsel %vm269, %v835, %v834
    %837 = vrot.lane.b32.xlu0 %v836, 32
    %v838 = vpop.permute.xlu0 %837
    %v839 = vsel %vm136, %v838, 0
    %841 = vmatprep.subr.mxu0 0.0
    %842 = vmatpush1.msra.mxu0 %v132
    %843 = vmatprep.subr.mxu0 0.0
    %844 = vmatpush1.msra.mxu0 %v133
    %845 = vmatprep.subr.mxu0 0.0
    %846 = vmatpush1.msra.mxu0 %v134
    %847 = vmatprep.subr.mxu0 0.0
    %848 = vmatpush1.msra.mxu0 %v135
    %849 = vmatprep.subr.mxu0 0.0
    %850 = vmatpush1.msra.mxu0 0.0
    %851 = vmatprep.subr.mxu0 0.0
    %852 = vmatpush1.msra.mxu0 0.0
    %853 = vmatprep.subr.mxu0 0.0
    %854 = vmatpush1.msra.mxu0 0.0
    %855 = vmatprep.subr.mxu0 0.0
    %856 = vmatpush1.msra.mxu0 0.0
    %857 = vmatprep.subr.mxu0 0.0
    %858 = vmatpush1.msra.mxu0 0.0
    %859 = vmatprep.subr.mxu0 0.0
    %860 = vmatpush1.msra.mxu0 0.0
    %861 = vmatprep.subr.mxu0 0.0
    %862 = vmatpush1.msra.mxu0 0.0
    %863 = vmatprep.subr.mxu0 0.0
    %864 = vmatpush1.msra.mxu0 0.0
    %865 = vmatprep.subr.mxu0 0.0
    %866 = vmatpush1.msra.mxu0 0.0
    %867 = vmatprep.subr.mxu0 0.0
    %868 = vmatpush1.msra.mxu0 0.0
    %869 = vmatprep.subr.mxu0 0.0
    %870 = vmatpush1.msra.mxu0 0.0
    %871 = vmatprep.subr.mxu0 0.0
    %872 = vmatpush1.msra.mxu0 0.0
    %873 = vmatprep.subr.mxu0 0.0
    %874 = vmatpush1.msra.mxu0 0.0
    %875 = vmatprep.subr.mxu0 0.0
    %876 = vmatpush1.msra.mxu0 0.0
    %877 = vmatprep.subr.mxu0 0.0
    %878 = vmatpush1.msra.mxu0 0.0
    %879 = vmatprep.subr.mxu0 0.0
    %880 = vmatpush1.msra.mxu0 0.0
    %881 = vmatprep.subr.mxu0 0.0
    %882 = vmatpush1.msra.mxu0 0.0
    %883 = vmatprep.subr.mxu0 0.0
    %884 = vmatpush1.msra.mxu0 0.0
    %885 = vmatprep.subr.mxu0 0.0
    %886 = vmatpush1.msra.mxu0 0.0
    %887 = vmatprep.subr.mxu0 0.0
    %888 = vmatpush1.msra.mxu0 0.0
    %889 = vmatprep.subr.mxu0 0.0
    %890 = vmatpush1.msra.mxu0 0.0
    %891 = vmatprep.subr.mxu0 0.0
    %892 = vmatpush1.msra.mxu0 0.0
    %893 = vmatprep.subr.mxu0 0.0
    %894 = vmatpush1.msra.mxu0 0.0
    %895 = vmatprep.subr.mxu0 0.0
    %896 = vmatpush1.msra.mxu0 0.0
    %897 = vmatprep.subr.mxu0 0.0
    %898 = vmatpush1.msra.mxu0 0.0
    %899 = vmatprep.subr.mxu0 0.0
    %900 = vmatpush1.msra.mxu0 0.0
    %901 = vmatprep.subr.mxu0 0.0
    %902 = vmatpush1.msra.mxu0 0.0
    %903 = vmatprep.subr.mxu0 0.0
    %904 = vmatpush1.msra.mxu0 0.0
    %905 = vmatprep.mubr.f32.mxu0 0.0
    %906 = vmatmul.mubr.f32.gmra.mrb[0].mxu0 %v839
    %v907 = vpop.f32.mrb[0].mxu0
    %v908 = vadd.f32 0.0, %v907
    %v909 = vpop.f32.mrb[0].mxu0
    %910 = vdwg.mxu0
    %v912 = vrot.slane %v908, 3
    %v913 = vrot.slane %v908, 4
    %v916 = vadd.f32 %v124, %v912
    %v917 = vadd.f32 %v129, %v913
    %v918 = vxor.u32 %v916, 2147483648
    %v919 = vxor.u32 %v917, 2147483648
    %v920 = vmul.f32 %v918, 1.442695
    %v921 = vpow.pop %v920
    %v922 = vmul.f32 %v919, 1.442695
    %v923 = vpow.pop %v922
    %v924 = vadd.f32 %v921, 1.0
    %v925 = vadd.f32 %v923, 1.0
    %v926 = vrcp.pop %v924
    %v927 = vmul.f32 1.0, %v926
    %v928 = vrcp.pop %v925
    %v929 = vmul.f32 1.0, %v928
    %v930 = vmul.f32 %v927, 2.0
    %v931 = vmul.f32 %v929, 2.0
    %v932 = vsub.f32 %v930, 1.0
    %v933 = vsub.f32 %v931, 1.0
    %v936 = vrot.slane %v818, 7
    %v937 = vrot.slane %v819, 7
    %v940 = vmul.f32 %v927, %v936
    %v941 = vmul.f32 %v929, %v937
    %944 = vrot.lane.b32.xlu0 %v932, 64
    %v945 = vpop.permute.xlu0 %944
    %946 = vrot.lane.b32.xlu0 %v933, 64
    %v947 = vpop.permute.xlu0 %946
    %v950 = vmul.f32 %v927, %v945
    %v951 = vmul.f32 %v929, %v947
    %954 = vrot.lane.b32.xlu0 %v950, 32
    %v955 = vpop.permute.xlu0 %954
    %956 = vrot.lane.b32.xlu0 %v951, 32
    %v957 = vpop.permute.xlu0 %956
    %v960 = vadd.f32 %v940, %v955
    %v961 = vadd.f32 %v941, %v957
    %v962 = vtanh.pop %v960
    %v963 = vtanh.pop %v961
    %966 = vrot.lane.b32.xlu0 %v962, 64
    %v967 = vpop.permute.xlu0 %966
    %968 = vrot.lane.b32.xlu0 %v963, 64
    %v969 = vpop.permute.xlu0 %968
    %v972 = vmul.f32 %v927, %v967
    %v973 = vmul.f32 %v929, %v969
    %v976 = vrot.slane %v972, 5
    %v977 = vrot.slane %v973, 4
    %v978 = vsel %vm269, %v977, %v976
    %979 = vrot.lane.b32.xlu0 %v978, 32
    %v980 = vpop.permute.xlu0 %979
    %v981 = vsel %vm136, %v980, 0
    %983 = vmatprep.subr.mxu0 0.0
    %984 = vmatpush1.msra.mxu0 %v132
    %985 = vmatprep.subr.mxu0 0.0
    %986 = vmatpush1.msra.mxu0 %v133
    %987 = vmatprep.subr.mxu0 0.0
    %988 = vmatpush1.msra.mxu0 %v134
    %989 = vmatprep.subr.mxu0 0.0
    %990 = vmatpush1.msra.mxu0 %v135
    %991 = vmatprep.subr.mxu0 0.0
    %992 = vmatpush1.msra.mxu0 0.0
    %993 = vmatprep.subr.mxu0 0.0
    %994 = vmatpush1.msra.mxu0 0.0
    %995 = vmatprep.subr.mxu0 0.0
    %996 = vmatpush1.msra.mxu0 0.0
    %997 = vmatprep.subr.mxu0 0.0
    %998 = vmatpush1.msra.mxu0 0.0
    %999 = vmatprep.subr.mxu0 0.0
    %1000 = vmatpush1.msra.mxu0 0.0
    %1001 = vmatprep.subr.mxu0 0.0
    %1002 = vmatpush1.msra.mxu0 0.0
    %1003 = vmatprep.subr.mxu0 0.0
    %1004 = vmatpush1.msra.mxu0 0.0
    %1005 = vmatprep.subr.mxu0 0.0
    %1006 = vmatpush1.msra.mxu0 0.0
    %1007 = vmatprep.subr.mxu0 0.0
    %1008 = vmatpush1.msra.mxu0 0.0
    %1009 = vmatprep.subr.mxu0 0.0
    %1010 = vmatpush1.msra.mxu0 0.0
    %1011 = vmatprep.subr.mxu0 0.0
    %1012 = vmatpush1.msra.mxu0 0.0
    %1013 = vmatprep.subr.mxu0 0.0
    %1014 = vmatpush1.msra.mxu0 0.0
    %1015 = vmatprep.subr.mxu0 0.0
    %1016 = vmatpush1.msra.mxu0 0.0
    %1017 = vmatprep.subr.mxu0 0.0
    %1018 = vmatpush1.msra.mxu0 0.0
    %1019 = vmatprep.subr.mxu0 0.0
    %1020 = vmatpush1.msra.mxu0 0.0
    %1021 = vmatprep.subr.mxu0 0.0
    %1022 = vmatpush1.msra.mxu0 0.0
    %1023 = vmatprep.subr.mxu0 0.0
    %1024 = vmatpush1.msra.mxu0 0.0
    %1025 = vmatprep.subr.mxu0 0.0
    %1026 = vmatpush1.msra.mxu0 0.0
    %1027 = vmatprep.subr.mxu0 0.0
    %1028 = vmatpush1.msra.mxu0 0.0
    %1029 = vmatprep.subr.mxu0 0.0
    %1030 = vmatpush1.msra.mxu0 0.0
    %1031 = vmatprep.subr.mxu0 0.0
    %1032 = vmatpush1.msra.mxu0 0.0
    %1033 = vmatprep.subr.mxu0 0.0
    %1034 = vmatpush1.msra.mxu0 0.0
    %1035 = vmatprep.subr.mxu0 0.0
    %1036 = vmatpush1.msra.mxu0 0.0
    %1037 = vmatprep.subr.mxu0 0.0
    %1038 = vmatpush1.msra.mxu0 0.0
    %1039 = vmatprep.subr.mxu0 0.0
    %1040 = vmatpush1.msra.mxu0 0.0
    %1041 = vmatprep.subr.mxu0 0.0
    %1042 = vmatpush1.msra.mxu0 0.0
    %1043 = vmatprep.subr.mxu0 0.0
    %1044 = vmatpush1.msra.mxu0 0.0
    %1045 = vmatprep.subr.mxu0 0.0
    %1046 = vmatpush1.msra.mxu0 0.0
    %1047 = vmatprep.mubr.f32.mxu0 0.0
    %1048 = vmatmul.mubr.f32.gmra.mrb[0].mxu0 %v981
    %v1049 = vpop.f32.mrb[0].mxu0
    %v1050 = vadd.f32 0.0, %v1049
    %v1051 = vpop.f32.mrb[0].mxu0
    %1052 = vdwg.mxu0
    %v1054 = vrot.slane %v1050, 2
    %v1055 = vrot.slane %v1050, 3
    %v1058 = vadd.f32 %v124, %v1054
    %v1059 = vadd.f32 %v129, %v1055
    %v1060 = vxor.u32 %v1058, 2147483648
    %v1061 = vxor.u32 %v1059, 2147483648
    %v1062 = vmul.f32 %v1060, 1.442695
    %v1063 = vpow.pop %v1062
    %v1064 = vmul.f32 %v1061, 1.442695
    %v1065 = vpow.pop %v1064
    %v1066 = vadd.f32 %v1063, 1.0
    %v1067 = vadd.f32 %v1065, 1.0
    %v1068 = vrcp.pop %v1066
    %v1069 = vmul.f32 1.0, %v1068
    %v1070 = vrcp.pop %v1067
    %v1071 = vmul.f32 1.0, %v1070
    %v1072 = vmul.f32 %v1069, 2.0
    %v1073 = vmul.f32 %v1071, 2.0
    %v1074 = vsub.f32 %v1072, 1.0
    %v1075 = vsub.f32 %v1073, 1.0
    %v1078 = vrot.slane %v960, 7
    %v1079 = vrot.slane %v961, 7
    %v1082 = vmul.f32 %v1069, %v1078
    %v1083 = vmul.f32 %v1071, %v1079
    %1086 = vrot.lane.b32.xlu0 %v1074, 64
    %v1087 = vpop.permute.xlu0 %1086
    %1088 = vrot.lane.b32.xlu0 %v1075, 64
    %v1089 = vpop.permute.xlu0 %1088
    %v1092 = vmul.f32 %v1069, %v1087
    %v1093 = vmul.f32 %v1071, %v1089
    %1096 = vrot.lane.b32.xlu0 %v1092, 32
    %v1097 = vpop.permute.xlu0 %1096
    %1098 = vrot.lane.b32.xlu0 %v1093, 32
    %v1099 = vpop.permute.xlu0 %1098
    %v1102 = vadd.f32 %v1082, %v1097
    %v1103 = vadd.f32 %v1083, %v1099
    %v1104 = vtanh.pop %v1102
    %v1105 = vtanh.pop %v1103
    %1108 = vrot.lane.b32.xlu0 %v1104, 64
    %v1109 = vpop.permute.xlu0 %1108
    %1110 = vrot.lane.b32.xlu0 %v1105, 64
    %v1111 = vpop.permute.xlu0 %1110
    %v1114 = vmul.f32 %v1069, %v1109
    %v1115 = vmul.f32 %v1071, %v1111
    %v1118 = vrot.slane %v1114, 6
    %v1119 = vrot.slane %v1115, 5
    %v1120 = vsel %vm269, %v1119, %v1118
    %1121 = vrot.lane.b32.xlu0 %v1120, 32
    %v1122 = vpop.permute.xlu0 %1121
    %v1123 = vsel %vm136, %v1122, 0
    %1125 = vmatprep.subr.mxu0 0.0
    %1126 = vmatpush1.msra.mxu0 %v132
    %1127 = vmatprep.subr.mxu0 0.0
    %1128 = vmatpush1.msra.mxu0 %v133
    %1129 = vmatprep.subr.mxu0 0.0
    %1130 = vmatpush1.msra.mxu0 %v134
    %1131 = vmatprep.subr.mxu0 0.0
    %1132 = vmatpush1.msra.mxu0 %v135
    %1133 = vmatprep.subr.mxu0 0.0
    %1134 = vmatpush1.msra.mxu0 0.0
    %1135 = vmatprep.subr.mxu0 0.0
    %1136 = vmatpush1.msra.mxu0 0.0
    %1137 = vmatprep.subr.mxu0 0.0
    %1138 = vmatpush1.msra.mxu0 0.0
    %1139 = vmatprep.subr.mxu0 0.0
    %1140 = vmatpush1.msra.mxu0 0.0
    %1141 = vmatprep.subr.mxu0 0.0
    %1142 = vmatpush1.msra.mxu0 0.0
    %1143 = vmatprep.subr.mxu0 0.0
    %1144 = vmatpush1.msra.mxu0 0.0
    %1145 = vmatprep.subr.mxu0 0.0
    %1146 = vmatpush1.msra.mxu0 0.0
    %1147 = vmatprep.subr.mxu0 0.0
    %1148 = vmatpush1.msra.mxu0 0.0
    %1149 = vmatprep.subr.mxu0 0.0
    %1150 = vmatpush1.msra.mxu0 0.0
    %1151 = vmatprep.subr.mxu0 0.0
    %1152 = vmatpush1.msra.mxu0 0.0
    %1153 = vmatprep.subr.mxu0 0.0
    %1154 = vmatpush1.msra.mxu0 0.0
    %1155 = vmatprep.subr.mxu0 0.0
    %1156 = vmatpush1.msra.mxu0 0.0
    %1157 = vmatprep.subr.mxu0 0.0
    %1158 = vmatpush1.msra.mxu0 0.0
    %1159 = vmatprep.subr.mxu0 0.0
    %1160 = vmatpush1.msra.mxu0 0.0
    %1161 = vmatprep.subr.mxu0 0.0
    %1162 = vmatpush1.msra.mxu0 0.0
    %1163 = vmatprep.subr.mxu0 0.0
    %1164 = vmatpush1.msra.mxu0 0.0
    %1165 = vmatprep.subr.mxu0 0.0
    %1166 = vmatpush1.msra.mxu0 0.0
    %1167 = vmatprep.subr.mxu0 0.0
    %1168 = vmatpush1.msra.mxu0 0.0
    %1169 = vmatprep.subr.mxu0 0.0
    %1170 = vmatpush1.msra.mxu0 0.0
    %1171 = vmatprep.subr.mxu0 0.0
    %1172 = vmatpush1.msra.mxu0 0.0
    %1173 = vmatprep.subr.mxu0 0.0
    %1174 = vmatpush1.msra.mxu0 0.0
    %1175 = vmatprep.subr.mxu0 0.0
    %1176 = vmatpush1.msra.mxu0 0.0
    %1177 = vmatprep.subr.mxu0 0.0
    %1178 = vmatpush1.msra.mxu0 0.0
    %1179 = vmatprep.subr.mxu0 0.0
    %1180 = vmatpush1.msra.mxu0 0.0
    %1181 = vmatprep.subr.mxu0 0.0
    %1182 = vmatpush1.msra.mxu0 0.0
    %1183 = vmatprep.subr.mxu0 0.0
    %1184 = vmatpush1.msra.mxu0 0.0
    %1185 = vmatprep.subr.mxu0 0.0
    %1186 = vmatpush1.msra.mxu0 0.0
    %1187 = vmatprep.subr.mxu0 0.0
    %1188 = vmatpush1.msra.mxu0 0.0
    %1189 = vmatprep.mubr.f32.mxu0 0.0
    %1190 = vmatmul.mubr.f32.gmra.mrb[0].mxu0 %v1123
    %v1191 = vpop.f32.mrb[0].mxu0
    %v1192 = vadd.f32 0.0, %v1191
    %v1193 = vpop.f32.mrb[0].mxu0
    %1194 = vdwg.mxu0
    %v1196 = vrot.slane %v1192, 1
    %v1197 = vrot.slane %v1192, 2
    %v1200 = vadd.f32 %v124, %v1196
    %v1201 = vadd.f32 %v129, %v1197
    %v1202 = vxor.u32 %v1200, 2147483648
    %v1203 = vxor.u32 %v1201, 2147483648
    %v1204 = vmul.f32 %v1202, 1.442695
    %v1205 = vpow.pop %v1204
    %v1206 = vmul.f32 %v1203, 1.442695
    %v1207 = vpow.pop %v1206
    %v1208 = vadd.f32 %v1205, 1.0
    %v1209 = vadd.f32 %v1207, 1.0
    %v1210 = vrcp.pop %v1208
    %v1211 = vmul.f32 1.0, %v1210
    %v1212 = vrcp.pop %v1209
    %v1213 = vmul.f32 1.0, %v1212
    %v1214 = vmul.f32 %v1211, 2.0
    %v1215 = vmul.f32 %v1213, 2.0
    %v1216 = vsub.f32 %v1214, 1.0
    %v1217 = vsub.f32 %v1215, 1.0
    %v1220 = vrot.slane %v1102, 7
    %v1221 = vrot.slane %v1103, 7
    %v1224 = vmul.f32 %v1211, %v1220
    %v1225 = vmul.f32 %v1213, %v1221
    %1228 = vrot.lane.b32.xlu0 %v1216, 64
    %v1229 = vpop.permute.xlu0 %1228
    %1230 = vrot.lane.b32.xlu0 %v1217, 64
    %v1231 = vpop.permute.xlu0 %1230
    %v1234 = vmul.f32 %v1211, %v1229
    %v1235 = vmul.f32 %v1213, %v1231
    %1238 = vrot.lane.b32.xlu0 %v1234, 32
    %v1239 = vpop.permute.xlu0 %1238
    %1240 = vrot.lane.b32.xlu0 %v1235, 32
    %v1241 = vpop.permute.xlu0 %1240
    %v1244 = vadd.f32 %v1224, %v1239
    %v1245 = vadd.f32 %v1225, %v1241
    %v1246 = vtanh.pop %v1244
    %v1247 = vtanh.pop %v1245
    %1250 = vrot.lane.b32.xlu0 %v1246, 64
    %v1251 = vpop.permute.xlu0 %1250
    %1252 = vrot.lane.b32.xlu0 %v1247, 64
    %v1253 = vpop.permute.xlu0 %1252
    %v1256 = vmul.f32 %v1211, %v1251
    %v1257 = vmul.f32 %v1213, %v1253
    %v1258 = vld [vmem:[%s4] sm:$0x1]
    %v1260 = vlaneseq
    %v1261 = vshrl.u32 %v1260, 7
    %v1262 = vsub.s32 0, %v1261
    %v1263 = vrot.slane %v1258, %v1262
    %1264 = vrot.lane.b32.xlu0 %v1263, 96
    %v1265 = vpop.permute.xlu0 %1264
    %v1267 = vmul.f32 %v1256, %v1265
    %v1268 = vmul.f32 %v1257, %v1265
    %v1271 = vrot.slane %v1268, 7
    %1272 = vrot.lane.b32.xlu0 %v1267, 32
    %v1273 = vpop.permute.xlu0 %1272
    %1274 = vrot.lane.b32.xlu0 %v1271, 32
    %v1275 = vpop.permute.xlu0 %1274
    %vm1278 = vcmask 261127
    %v1279 = vsel %vm1278, %v1273, 0.0
    %1280 = vadd.xlane.f32.xlu0 %v1279
    %v1281 = vpop.xlane.xlu0 %1280
    %vm1282 = vcmask 253952
    %v1283 = vsel %vm1282, %v1275, 0.0
    %1284 = vadd.xlane.f32.xlu0 %v1283
    %v1285 = vpop.xlane.xlu0 %1284
    %s1286 = sld [smem:[#allocation2]]
    %v1287 = vstv %s1286
    %v1288 = vadd.f32 %v1281, %v1287
    %v1289 = vadd.f32 %v1285, %v1287
    %vm1290 = vcmask 7175
    %1291 = vst.msk [vmem:[%s6 - $0x7] sm:$0x80] %vm1290, %v1288
    %vm1292 = vcmask 0
    %1293 = vst.msk [vmem:[%s6 + $0x1] sm:$0x1] %vm1292, %v1289
    // Predicated region
    $region30: #{tpu_custom_call.1} parent=1 // pred_check
      _
    $region31: #{tpu_custom_call.1} parent=1 // pred_check_branch
      %1295 = sbr.rel (0) target = $region33
    $region32: #{tpu_custom_call.1} parent=1 // pred_region
      _
    $region33: #{tpu_custom_call.1} parent=1 // pred_fallthru
      _
    // Predicated region
    $region34: #{tpu_custom_call.1} parent=1 // pred_check
      _
    $region35: #{tpu_custom_call.1} parent=1 // pred_check_branch
      %1297 = sbr.rel (0) target = $region37
    $region36: #{tpu_custom_call.1} parent=1 // pred_region
      _
    $region37: #{tpu_custom_call.1} parent=1 // pred_fallthru
      _
    %1298 = vsyncpa [#allocation4], 1

</llo_original>
